<compile_context>
chip_gen: v6e
topology: v6e:2x2x1
jax: 0.10.0
libtpu: 0.0.40
codegen_flags: <defaults>
</compile_context>

<pallas_src>
import functools

import jax
import jax.numpy as jnp
from jax.experimental import pallas as pl
from jax.experimental.pallas import tpu as pltpu

LEAKY_SLOPE = 0.01  # torch.nn.LeakyReLU default negative_slope
LANE = 128


def _leaky_relu(x):
    return jnp.where(x > 0, x, LEAKY_SLOPE * x)


def _round_up(x, m):
    return ((x + m - 1) // m) * m


# --------------------------------------------------------------------------
# Kernel
# --------------------------------------------------------------------------
def _mlp3_kernel(x_ref, w1_ref, b1_ref, w2_ref, b2_ref, w3_ref, b3_ref, o_ref,
                 *, use_bf16):
    """One batch tile of x; all (in,out) weights + (1,out) biases resident in VMEM."""

    def dot(a, w_ref):
        w = w_ref[...]                      # already bf16 if use_bf16 (pre-cast once)
        if use_bf16:
            a = a.astype(jnp.bfloat16)      # activation cast only; accumulate in f32
        return jnp.dot(a, w, preferred_element_type=jnp.float32)

    x = x_ref[...]                          # f32 activation tile

    h = _leaky_relu(dot(x, w1_ref) + b1_ref[...])   # Linear + LeakyReLU (1)
    h = _leaky_relu(dot(h, w2_ref) + b2_ref[...])   # Linear + LeakyReLU (2)
    h = _leaky_relu(dot(h, w3_ref) + b3_ref[...])   # Linear + LeakyReLU (3)

    o_ref[...] = h.astype(o_ref.dtype)


# --------------------------------------------------------------------------
# Tiling / VMEM helpers
# --------------------------------------------------------------------------
def _pick_block_b(B):
    """Batch-tile size. The wrapper pads B up to a multiple of this value."""
    if B < 128:
        return B                                    # tiny batch: one grid step
    if B <= 1024:
        # >= 2 grid steps so v7x's second TensorCore gets work; multiple of 8
        # (sublane) so the block shape is legal when it does not equal B.
        return _round_up(pl.cdiv(B, 2), 8)
    # Large batches: big MXU-aligned tiles (32-wide f32 rows make small tiles
    # pure per-step overhead); cap keeps tile + intermediates well under VMEM.
    return min(_round_up(pl.cdiv(B, 2), 256), 4096)


def _vmem_cap_bytes():
    """Generation-aware VMEM ceiling (~80% of physical); safe fallback = 64 MiB."""
    try:
        cap = int(pltpu.get_tpu_info().vmem_capacity_bytes)
    except Exception:
        cap = 64 << 20
    return int(0.8 * cap)


# --------------------------------------------------------------------------
# Parameter repacking (one-time, host side)
# --------------------------------------------------------------------------
def _pad2(a, rows, cols):
    return jnp.pad(a, ((0, rows - a.shape[0]), (0, cols - a.shape[1])))


def prepare_params(torch_params, use_bf16=False):
    """One-time repack: torch (out,in) weights -> (in,out), biases -> (1,out),
    hidden/output dims zero-padded to multiples of 128 (lane-dense), optional
    bf16 weight pre-cast.  Hoisted out of the jitted forward."""
    w1 = jnp.asarray(torch_params["w1"], jnp.float32).T   # (d_in, d_h1)
    w2 = jnp.asarray(torch_params["w2"], jnp.float32).T   # (d_h1, d_h2)
    w3 = jnp.asarray(torch_params["w3"], jnp.float32).T   # (d_h2, d_out)
    b1 = jnp.asarray(torch_params["b1"], jnp.float32)
    b2 = jnp.asarray(torch_params["b2"], jnp.float32)
    b3 = jnp.asarray(torch_params["b3"], jnp.float32)

    d_in, d_h1 = w1.shape
    d_h2 = w2.shape[1]
    d_out = w3.shape[1]
    h1p, h2p, outp = (_round_up(d, LANE) for d in (d_h1, d_h2, d_out))

    # d_in intentionally NOT padded: avoids padding x on every call; zero-padded
    # hidden/output columns stay exactly zero through LeakyReLU, so results are exact.
    w1p = _pad2(w1, d_in, h1p)
    w2p = _pad2(w2, h1p, h2p)
    w3p = _pad2(w3, h2p, outp)
    b1p = jnp.pad(b1, (0, h1p - d_h1)).reshape(1, -1)
    b2p = jnp.pad(b2, (0, h2p - d_h2)).reshape(1, -1)
    b3p = jnp.pad(b3, (0, outp - d_out)).reshape(1, -1)

    wdtype = jnp.bfloat16 if use_bf16 else jnp.float32
    return {
        "w1": w1p.astype(wdtype), "w2": w2p.astype(wdtype), "w3": w3p.astype(wdtype),
        "b1": b1p, "b2": b2p, "b3": b3p,          # biases stay f32 (added post-matmul)
        "d_out": int(d_out),                      # original output width (for slicing)
    }


# --------------------------------------------------------------------------
# Forward
# --------------------------------------------------------------------------
@functools.partial(jax.jit, static_argnames=("block_b", "d_out"))
def _mlp3_forward_jit(x, p, *, block_b, d_out):
    w1, b1 = p["w1"], p["b1"]
    w2, b2 = p["w2"], p["b2"]
    w3, b3 = p["w3"], p["b3"]
    use_bf16 = (w1.dtype == jnp.bfloat16)

    B, d_in = x.shape
    d_h1 = w1.shape[1]
    d_h2 = w2.shape[1]
    d_out_pad = w3.shape[1]

    # Pad the batch up to a multiple of the tile (irregular batches stay tiled).
    B_pad = _round_up(B, block_b)
    if B_pad != B:
        x = jnp.pad(x, ((0, B_pad - B), (0, 0)))
    grid = (B_pad // block_b,)

    # VMEM budget: double-buffered x/out tiles + (double-buffered) weights +
    # f32 intermediates, 2x headroom, clamped to ~80% of physical VMEM.
    w_bytes = sum(a.size * a.dtype.itemsize for a in (w1, w2, w3, b1, b2, b3))
    tile_io_bytes = 2 * block_b * (d_in + d_out_pad) * 4
    act_bytes = block_b * (d_h1 + d_h2 + d_out_pad) * 4
    needed = tile_io_bytes + 2 * w_bytes + act_bytes
    vmem_limit_bytes = int(min(_vmem_cap_bytes(), max(2 * needed, 16 << 20)))

    flops = 2 * B_pad * (d_in * d_h1 + d_h1 * d_h2 + d_h2 * d_out_pad)
    bytes_accessed = x.size * 4 + w_bytes + B_pad * d_out_pad * 4
    cost = pl.CostEstimate(flops=flops, transcendentals=0,
                           bytes_accessed=bytes_accessed)

    # Weights/biases: full-array blocks, constant block index across the grid.
    full = lambda shape: pl.BlockSpec(shape, lambda i: (0, 0))
    kernel = functools.partial(_mlp3_kernel, use_bf16=use_bf16)

    out = pl.pallas_call(
        kernel,
        out_shape=jax.ShapeDtypeStruct((B_pad, d_out_pad), x.dtype),
        grid_spec=pltpu.PrefetchScalarGridSpec(
            num_scalar_prefetch=0,
            grid=grid,
            in_specs=[
                pl.BlockSpec((block_b, d_in), lambda i: (i, 0)),   # x tile
                full(w1.shape), full(b1.shape),
                full(w2.shape), full(b2.shape),
                full(w3.shape), full(b3.shape),
            ],
            out_specs=pl.BlockSpec((block_b, d_out_pad), lambda i: (i, 0)),
        ),
        compiler_params=pltpu.CompilerParams(
            dimension_semantics=("parallel",),
            vmem_limit_bytes=vmem_limit_bytes,
        ),
        cost_estimate=cost,
    )(x, w1, b1, w2, b2, w3, b3)

    # Drop batch / feature padding.
    return out[:B, :d_out]


def mlp3_forward(x, kparams, block_b=None):
    """x: (B, d_in) f32.  kparams: output of prepare_params()."""
    d_out = kparams["d_out"]
    arrays = {k: v for k, v in kparams.items() if k != "d_out"}
    if block_b is None:
        block_b = _pick_block_b(x.shape[0])
    return _mlp3_forward_jit(x, arrays, block_b=int(block_b), d_out=int(d_out))


# --------------------------------------------------------------------------
# Synthetic parameters + pure-JAX reference (torch semantics)
# --------------------------------------------------------------------------
def init_params(key, w1, w2, w3, w4):
    """Deterministic synthetic parameters, torch Linear layout: weight (out, in)."""
    ks = jax.random.split(key, 6)
    scale = lambda fan_in: 1.0 / jnp.sqrt(fan_in)
    return {
        "w1": jax.random.uniform(ks[0], (w2, w1), jnp.float32, -scale(w1), scale(w1)),
        "b1": jax.random.uniform(ks[1], (w2,), jnp.float32, -scale(w1), scale(w1)),
        "w2": jax.random.uniform(ks[2], (w3, w2), jnp.float32, -scale(w2), scale(w2)),
        "b2": jax.random.uniform(ks[3], (w3,), jnp.float32, -scale(w2), scale(w2)),
        "w3": jax.random.uniform(ks[4], (w4, w3), jnp.float32, -scale(w3), scale(w3)),
        "b3": jax.random.uniform(ks[5], (w4,), jnp.float32, -scale(w3), scale(w3)),
    }


def reference_forward(x, p):
    """Pure-JAX reference matching torch semantics (y = x @ W.T + b)."""
    h = _leaky_relu(x @ p["w1"].T + p["b1"])
    h = _leaky_relu(h @ p["w2"].T + p["b2"])
    h = _leaky_relu(h @ p["w3"].T + p["b3"])
    return h


if __name__ == "__main__":
    # Small shapes consistent with the module: w1=32, w2=64, w3=64, w4=32.
    W1, W2, W3, W4 = 32, 64, 64, 32
    BATCH = 16

    key = jax.random.PRNGKey(0)
    kx, kp, kx2 = jax.random.split(key, 3)
    x = jax.random.normal(kx, (BATCH, W1), dtype=jnp.float32)
    params = init_params(kp, W1, W2, W3, W4)

    # ---- f32 path (tight tolerance), tiny batch -> single grid step -------
    kparams_f32 = prepare_params(params)                    # one-time repack + pad
    out = jax.block_until_ready(mlp3_forward(x, kparams_f32))
    ref = reference_forward(x, params)
    assert out.shape == (BATCH, W4), out.shape
    assert jnp.allclose(out, ref, atol=1e-5, rtol=1e-5), "f32 mismatch vs reference"

    # ---- irregular larger batch: exercises batch padding + grid >= 2 ------
    x2 = jax.random.normal(kx2, (300, W1), dtype=jnp.float32)
    out2 = jax.block_until_ready(mlp3_forward(x2, kparams_f32))
    ref2 = reference_forward(x2, params)
    assert out2.shape == (300, W4), out2.shape
    assert jnp.allclose(out2, ref2, atol=1e-5, rtol=1e-5), "padded-batch mismatch"

    # ---- bf16-MXU path (recommended default on v6e/v7x); f32 accumulation --
    kparams_bf16 = prepare_params(params, use_bf16=True)    # weights pre-cast once
    out_bf16 = jax.block_until_ready(mlp3_forward(x, kparams_bf16))
    assert jnp.allclose(out_bf16, ref, atol=5e-2, rtol=5e-2), "bf16 path mismatch"

    print("KERNEL_OK")
</pallas_src>

<mosaic_0001>
module attributes {stable_mosaic.version = 11 : i64} {
  func.func @_mlp3_kernel(%arg0: i32, %arg1: memref<16x32xf32, #tpu.memory_space<vmem>>, %arg2: memref<32x128xf32, #tpu.memory_space<vmem>>, %arg3: memref<1x128xf32, #tpu.memory_space<vmem>>, %arg4: memref<128x128xf32, #tpu.memory_space<vmem>>, %arg5: memref<1x128xf32, #tpu.memory_space<vmem>>, %arg6: memref<128x128xf32, #tpu.memory_space<vmem>>, %arg7: memref<1x128xf32, #tpu.memory_space<vmem>>, %arg8: memref<16x128xf32, #tpu.memory_space<vmem>>) attributes {dimension_semantics = [#tpu.dimension_semantics<parallel>], iteration_bounds = array<i64: 1>, scalar_prefetch = 0 : i64, scratch_operands = 0 : i64, tpu.core_type = #tpu.core_type<tc>, window_params = [{transform_indices = @transform_0, window_bounds = array<i64: 16, 32>}, {pipeline_mode = #tpu.pipeline_mode<synchronous>, transform_indices = @transform_1, window_bounds = array<i64: 32, 128>}, {pipeline_mode = #tpu.pipeline_mode<synchronous>, transform_indices = @transform_2, window_bounds = array<i64: 1, 128>}, {pipeline_mode = #tpu.pipeline_mode<synchronous>, transform_indices = @transform_3, window_bounds = array<i64: 128, 128>}, {pipeline_mode = #tpu.pipeline_mode<synchronous>, transform_indices = @transform_4, window_bounds = array<i64: 1, 128>}, {pipeline_mode = #tpu.pipeline_mode<synchronous>, transform_indices = @transform_5, window_bounds = array<i64: 128, 128>}, {pipeline_mode = #tpu.pipeline_mode<synchronous>, transform_indices = @transform_6, window_bounds = array<i64: 1, 128>}, {transform_indices = @transform_7, window_bounds = array<i64: 16, 128>}]} {
    %c0 = arith.constant 0 : index
    %c0_0 = arith.constant 0 : index
    %0 = vector.load %arg1[%c0, %c0_0] : memref<16x32xf32, #tpu.memory_space<vmem>>, vector<16x32xf32>
    %c0_1 = arith.constant 0 : index
    %c0_2 = arith.constant 0 : index
    %1 = vector.load %arg2[%c0_1, %c0_2] : memref<32x128xf32, #tpu.memory_space<vmem>>, vector<32x128xf32>
    %cst = arith.constant dense<0.000000e+00> : vector<16x128xf32>
    %2 = tpu.matmul %0, %1, %cst {dimension_numbers = #tpu.dot_dimension_numbers<[1], [0], [0], [1], [0, 0, 1, 1], [], []>} : vector<16x32xf32>, vector<32x128xf32>, vector<16x128xf32> -> vector<16x128xf32>
    %c0_3 = arith.constant 0 : index
    %c0_4 = arith.constant 0 : index
    %3 = vector.load %arg3[%c0_3, %c0_4] : memref<1x128xf32, #tpu.memory_space<vmem>>, vector<1x128xf32>
    %4 = vector.broadcast %3 : vector<1x128xf32> to vector<16x128xf32>
    %5 = arith.addf %2, %4 : vector<16x128xf32>
    %cst_5 = arith.constant 0.000000e+00 : f32
    %6 = vector.broadcast %cst_5 : f32 to vector<16x128xf32>
    %7 = arith.cmpf ogt, %5, %6 : vector<16x128xf32>
    %cst_6 = arith.constant 0.00999999977 : f32
    %8 = vector.broadcast %cst_6 : f32 to vector<16x128xf32>
    %9 = arith.mulf %8, %5 : vector<16x128xf32>
    %10 = arith.select %7, %5, %9 : vector<16x128xi1>, vector<16x128xf32>
    %c0_7 = arith.constant 0 : index
    %c0_8 = arith.constant 0 : index
    %11 = vector.load %arg4[%c0_7, %c0_8] : memref<128x128xf32, #tpu.memory_space<vmem>>, vector<128x128xf32>
    %cst_9 = arith.constant dense<0.000000e+00> : vector<16x128xf32>
    %12 = tpu.matmul %10, %11, %cst_9 {dimension_numbers = #tpu.dot_dimension_numbers<[1], [0], [0], [1], [0, 0, 1, 1], [], []>} : vector<16x128xf32>, vector<128x128xf32>, vector<16x128xf32> -> vector<16x128xf32>
    %c0_10 = arith.constant 0 : index
    %c0_11 = arith.constant 0 : index
    %13 = vector.load %arg5[%c0_10, %c0_11] : memref<1x128xf32, #tpu.memory_space<vmem>>, vector<1x128xf32>
    %14 = vector.broadcast %13 : vector<1x128xf32> to vector<16x128xf32>
    %15 = arith.addf %12, %14 : vector<16x128xf32>
    %cst_12 = arith.constant 0.000000e+00 : f32
    %16 = vector.broadcast %cst_12 : f32 to vector<16x128xf32>
    %17 = arith.cmpf ogt, %15, %16 : vector<16x128xf32>
    %cst_13 = arith.constant 0.00999999977 : f32
    %18 = vector.broadcast %cst_13 : f32 to vector<16x128xf32>
    %19 = arith.mulf %18, %15 : vector<16x128xf32>
    %20 = arith.select %17, %15, %19 : vector<16x128xi1>, vector<16x128xf32>
    %c0_14 = arith.constant 0 : index
    %c0_15 = arith.constant 0 : index
    %21 = vector.load %arg6[%c0_14, %c0_15] : memref<128x128xf32, #tpu.memory_space<vmem>>, vector<128x128xf32>
    %cst_16 = arith.constant dense<0.000000e+00> : vector<16x128xf32>
    %22 = tpu.matmul %20, %21, %cst_16 {dimension_numbers = #tpu.dot_dimension_numbers<[1], [0], [0], [1], [0, 0, 1, 1], [], []>} : vector<16x128xf32>, vector<128x128xf32>, vector<16x128xf32> -> vector<16x128xf32>
    %c0_17 = arith.constant 0 : index
    %c0_18 = arith.constant 0 : index
    %23 = vector.load %arg7[%c0_17, %c0_18] : memref<1x128xf32, #tpu.memory_space<vmem>>, vector<1x128xf32>
    %24 = vector.broadcast %23 : vector<1x128xf32> to vector<16x128xf32>
    %25 = arith.addf %22, %24 : vector<16x128xf32>
    %cst_19 = arith.constant 0.000000e+00 : f32
    %26 = vector.broadcast %cst_19 : f32 to vector<16x128xf32>
    %27 = arith.cmpf ogt, %25, %26 : vector<16x128xf32>
    %cst_20 = arith.constant 0.00999999977 : f32
    %28 = vector.broadcast %cst_20 : f32 to vector<16x128xf32>
    %29 = arith.mulf %28, %25 : vector<16x128xf32>
    %30 = arith.select %27, %25, %29 : vector<16x128xi1>, vector<16x128xf32>
    %c0_21 = arith.constant 0 : index
    %c0_22 = arith.constant 0 : index
    %31 = vector.load %arg8[%c0_21, %c0_22] : memref<16x128xf32, #tpu.memory_space<vmem>>, vector<16x128xf32>
    tpu.vector_store %arg8[%c0_21, %c0_22], %30 {strides = array<i32>} : memref<16x128xf32, #tpu.memory_space<vmem>>, vector<16x128xf32>,
    return
  }
  func.func @transform_0(%arg0: i32) -> (i32, i32) {
    %c0_i32 = arith.constant 0 : i32
    %c0_i32_0 = arith.constant 0 : i32
    return %arg0, %c0_i32 : i32, i32
  }
  func.func @transform_1(%arg0: i32) -> (i32, i32) {
    %c0_i32 = arith.constant 0 : i32
    %c0_i32_0 = arith.constant 0 : i32
    %c0_i32_1 = arith.constant 0 : i32
    return %c0_i32, %c0_i32_0 : i32, i32
  }
  func.func @transform_2(%arg0: i32) -> (i32, i32) {
    %c0_i32 = arith.constant 0 : i32
    %c0_i32_0 = arith.constant 0 : i32
    %c0_i32_1 = arith.constant 0 : i32
    return %c0_i32, %c0_i32_0 : i32, i32
  }
  func.func @transform_3(%arg0: i32) -> (i32, i32) {
    %c0_i32 = arith.constant 0 : i32
    %c0_i32_0 = arith.constant 0 : i32
    %c0_i32_1 = arith.constant 0 : i32
    return %c0_i32, %c0_i32_0 : i32, i32
  }
  func.func @transform_4(%arg0: i32) -> (i32, i32) {
    %c0_i32 = arith.constant 0 : i32
    %c0_i32_0 = arith.constant 0 : i32
    %c0_i32_1 = arith.constant 0 : i32
    return %c0_i32, %c0_i32_0 : i32, i32
  }
  func.func @transform_5(%arg0: i32) -> (i32, i32) {
    %c0_i32 = arith.constant 0 : i32
    %c0_i32_0 = arith.constant 0 : i32
    %c0_i32_1 = arith.constant 0 : i32
    return %c0_i32, %c0_i32_0 : i32, i32
  }
  func.func @transform_6(%arg0: i32) -> (i32, i32) {
    %c0_i32 = arith.constant 0 : i32
    %c0_i32_0 = arith.constant 0 : i32
    %c0_i32_1 = arith.constant 0 : i32
    return %c0_i32, %c0_i32_0 : i32, i32
  }
  func.func @transform_7(%arg0: i32) -> (i32, i32) {
    %c0_i32 = arith.constant 0 : i32
    %c0_i32_0 = arith.constant 0 : i32
    return %arg0, %c0_i32 : i32, i32
  }
}

</mosaic_0001>

<llo_original>
// kernel: _mlp3_forward_jit.1
$region0: #{_mlp3_forward_jit.1}
  #allocation0 [shape = 'u32[]', space=smem, size = 0x4, offset = 0x4, fixed_abs, tag = 'smem constant byte address 0x4 - core index']
  #allocation1 [shape = 'u32[144,128]{1,0:T(1,128)}', space=vmem, size = 0x12000, scoped, tag = 'internal scratch']
  %s0 = inlined_call_operand.hbm [shape: f32[16,32], index: 0, kind: input, shape index: {}]
  %s1 = inlined_call_operand.hbm [shape: f32[32,128], index: 1, kind: input, shape index: {}]
  %s2 = inlined_call_operand.vmem [shape: f32[1,128], index: 2, kind: input, shape index: {}]
  %s3 = inlined_call_operand.hbm [shape: f32[128,128], index: 3, kind: input, shape index: {}]
  %s4 = inlined_call_operand.vmem [shape: f32[1,128], index: 4, kind: input, shape index: {}]
  %s5 = inlined_call_operand.hbm [shape: f32[128,128], index: 5, kind: input, shape index: {}]
  %s6 = inlined_call_operand.vmem [shape: f32[1,128], index: 6, kind: input, shape index: {}]
  %s7 = inlined_call_operand.hbm [shape: f32[16,128], index: 7, kind: output, shape index: {}]
  %s8 = sld [smem:[#allocation0]]
  $region54: #{_mlp3_forward_jit.1} parent=0
    _
  %s10 = ssub.s32 1, %s8
  %s11 = scalar_select 0, %s10, %s8
  $region1: #{_mlp3_forward_jit.1} parent=0
    #allocation2 [shape = 'u8[8192]{0}', space=vmem, size = 0x2000, scoped, tag = 'input window, operand 0, single buffered']
    #allocation3 [shape = 's32[1]{0}', space=sflag, size = 0x4, scoped, tag = 'scoped memory for _mlp3_forward_jit.1']
    #allocation4 [shape = 's32[1]{0}', space=sflag, size = 0x4, scoped, tag = 'scoped memory for _mlp3_forward_jit.1']
    #allocation5 [shape = 'u8[16384]{0}', space=vmem, size = 0x4000, scoped, tag = 'input window, operand 1, single buffered']
    #allocation6 [shape = 's32[1]{0}', space=sflag, size = 0x4, scoped, tag = 'scoped memory for _mlp3_forward_jit.1']
    #allocation7 [shape = 'u8[65536]{0}', space=vmem, size = 0x10000, scoped, tag = 'input window, operand 3, single buffered']
    #allocation8 [shape = 'u8[65536]{0}', space=vmem, size = 0x10000, scoped, tag = 'input window, operand 5, single buffered']
    #allocation9 [shape = 's32[1]{0}', space=sflag, size = 0x4, scoped, tag = 'scoped memory for _mlp3_forward_jit.1']
    #allocation10 [shape = 'u8[8192]{0}', space=vmem, size = 0x2000, scoped, tag = 'output window, operand 0, single buffered']
    %12 = vsyncpa [#allocation3], 0
    %13 = vsyncpa [#allocation6], 0
    %14 = vsyncpa [#allocation9], 0
    %15 = vsyncpa [#allocation4], 0
    // Predicated region
    $region2: #{_mlp3_forward_jit.1} parent=1 // pred_check
      _
    $region3: #{_mlp3_forward_jit.1} parent=1 // pred_check_branch
      %17 = sbr.rel (0) target = $region5
    $region4: #{_mlp3_forward_jit.1} parent=1 // pred_region
      %s19 = ssub.s32 256, 256
      %20 = vsyncadd [#allocation3], %s19
      %s21 = sshll.u32 [#allocation2], 4
      %s22 = int_to_ptr.vmem [resolvable:$true] %s21
      %27 = dma.hbm_to_vmem [thread:$0]  %s0, 256, %s22, [#allocation3], 128, 128, 8
    $region5: #{_mlp3_forward_jit.1} parent=1 // pred_fallthru
      _
    // Predicated region
    $region6: #{_mlp3_forward_jit.1} parent=1 // pred_check
      _
    $region7: #{_mlp3_forward_jit.1} parent=1 // pred_check_branch
      %29 = sbr.rel (0) target = $region9
    $region8: #{_mlp3_forward_jit.1} parent=1 // pred_region
      %s31 = ssub.s32 512, 512
      %32 = vsyncadd [#allocation6], %s31
      %s33 = sshll.u32 [#allocation5], 4
      %s34 = int_to_ptr.vmem [resolvable:$true] %s33
      %39 = dma.hbm_to_vmem [thread:$0]  %s1, 512, %s34, [#allocation6], 128, 128, 8
    $region9: #{_mlp3_forward_jit.1} parent=1 // pred_fallthru
      _
    // Predicated region
    $region10: #{_mlp3_forward_jit.1} parent=1 // pred_check
      _
    $region11: #{_mlp3_forward_jit.1} parent=1 // pred_check_branch
      %41 = sbr.rel (0) target = $region13
    $region12: #{_mlp3_forward_jit.1} parent=1 // pred_region
      _
    $region13: #{_mlp3_forward_jit.1} parent=1 // pred_fallthru
      _
    // Predicated region
    $region14: #{_mlp3_forward_jit.1} parent=1 // pred_check
      _
    $region15: #{_mlp3_forward_jit.1} parent=1 // pred_check_branch
      %43 = sbr.rel (0) target = $region17
    $region16: #{_mlp3_forward_jit.1} parent=1 // pred_region
      %s45 = ssub.s32 2048, 2048
      %46 = vsyncadd [#allocation6], %s45
      %s47 = sshll.u32 [#allocation7], 4
      %s48 = int_to_ptr.vmem [resolvable:$true] %s47
      %53 = dma.hbm_to_vmem [thread:$0]  %s3, 2048, %s48, [#allocation6], 128, 128, 8
    $region17: #{_mlp3_forward_jit.1} parent=1 // pred_fallthru
      _
    // Predicated region
    $region18: #{_mlp3_forward_jit.1} parent=1 // pred_check
      _
    $region19: #{_mlp3_forward_jit.1} parent=1 // pred_check_branch
      %55 = sbr.rel (0) target = $region21
    $region20: #{_mlp3_forward_jit.1} parent=1 // pred_region
      _
    $region21: #{_mlp3_forward_jit.1} parent=1 // pred_fallthru
      _
    // Predicated region
    $region22: #{_mlp3_forward_jit.1} parent=1 // pred_check
      _
    $region23: #{_mlp3_forward_jit.1} parent=1 // pred_check_branch
      %57 = sbr.rel (0) target = $region25
    $region24: #{_mlp3_forward_jit.1} parent=1 // pred_region
      %s59 = ssub.s32 2048, 2048
      %60 = vsyncadd [#allocation9], %s59
      %s61 = sshll.u32 [#allocation8], 4
      %s62 = int_to_ptr.vmem [resolvable:$true] %s61
      %67 = dma.hbm_to_vmem [thread:$0]  %s5, 2048, %s62, [#allocation9], 128, 128, 8
    $region25: #{_mlp3_forward_jit.1} parent=1 // pred_fallthru
      _
    // Predicated region
    $region26: #{_mlp3_forward_jit.1} parent=1 // pred_check
      _
    $region27: #{_mlp3_forward_jit.1} parent=1 // pred_check_branch
      %69 = sbr.rel (0) target = $region29
    $region28: #{_mlp3_forward_jit.1} parent=1 // pred_region
      _
    $region29: #{_mlp3_forward_jit.1} parent=1 // pred_fallthru
      _
    // Predicated region
    $region30: #{_mlp3_forward_jit.1} parent=1 // pred_check
      _
    $region31: #{_mlp3_forward_jit.1} parent=1 // pred_check_branch
      %71 = sbr.rel (0) target = $region33
    $region32: #{_mlp3_forward_jit.1} parent=1 // pred_region
      %72 = dma.done [#allocation3], 256
    $region33: #{_mlp3_forward_jit.1} parent=1 // pred_fallthru
      _
    // Predicated region
    $region34: #{_mlp3_forward_jit.1} parent=1 // pred_check
      _
    $region35: #{_mlp3_forward_jit.1} parent=1 // pred_check_branch
      %74 = sbr.rel (0) target = $region37
    $region36: #{_mlp3_forward_jit.1} parent=1 // pred_region
      %75 = dma.done [#allocation6], 512
    $region37: #{_mlp3_forward_jit.1} parent=1 // pred_fallthru
      _
    // Predicated region
    $region38: #{_mlp3_forward_jit.1} parent=1 // pred_check
      _
    $region39: #{_mlp3_forward_jit.1} parent=1 // pred_check_branch
      %77 = sbr.rel (0) target = $region41
    $region40: #{_mlp3_forward_jit.1} parent=1 // pred_region
      %78 = dma.done [#allocation6], 2048
    $region41: #{_mlp3_forward_jit.1} parent=1 // pred_fallthru
      _
    // Predicated region
    $region42: #{_mlp3_forward_jit.1} parent=1 // pred_check
      _
    $region43: #{_mlp3_forward_jit.1} parent=1 // pred_check_branch
      %80 = sbr.rel (0) target = $region45
    $region44: #{_mlp3_forward_jit.1} parent=1 // pred_region
      %81 = dma.done [#allocation9], 2048
    $region45: #{_mlp3_forward_jit.1} parent=1 // pred_fallthru
      _
    %v82 = vld [vmem:[#allocation2] sm:$0xff]
    %v83 = vld [vmem:[#allocation2 + $0x8] sm:$0xff]
    %v84 = vld [vmem:[#allocation5] sm:$0xff]
    %v85 = vld [vmem:[#allocation5 + $0x8] sm:$0xff]
    %v86 = vld [vmem:[#allocation5 + $0x10] sm:$0xff]
    %v87 = vld [vmem:[#allocation5 + $0x18] sm:$0xff]
    %v88 = vld [vmem:[%s2] sm:$0x1]
    %v90 = vlaneseq
    %v91 = vshrl.u32 %v90, 7
    %v92 = vsub.s32 0, %v91
    %v93 = vrot.slane %v88, %v92
    %vm95 = vcmask 261120
    %v97 = vsel %vm95, %v82, 0
    %v100 = vsel %vm95, %v83, 0
    %102 = vmatprep.subr.mxu0 0.0
    %103 = vmatpush1.msra.mxu0 0.0
    %104 = vmatprep.subr.mxu0 0.0
    %105 = vmatpush1.msra.mxu0 0.0
    %106 = vmatprep.subr.mxu0 0.0
    %107 = vmatpush1.msra.mxu0 0.0
    %108 = vmatprep.subr.mxu0 0.0
    %109 = vmatpush1.msra.mxu0 0.0
    %110 = vmatprep.subr.mxu0 0.0
    %111 = vmatpush1.msra.mxu0 0.0
    %112 = vmatprep.subr.mxu0 0.0
    %113 = vmatpush1.msra.mxu0 0.0
    %114 = vmatprep.subr.mxu0 0.0
    %115 = vmatpush1.msra.mxu0 0.0
    %116 = vmatprep.subr.mxu0 0.0
    %117 = vmatpush1.msra.mxu0 0.0
    %118 = vmatprep.subr.mxu0 0.0
    %119 = vmatpush1.msra.mxu0 0.0
    %120 = vmatprep.subr.mxu0 0.0
    %121 = vmatpush1.msra.mxu0 0.0
    %122 = vmatprep.subr.mxu0 0.0
    %123 = vmatpush1.msra.mxu0 0.0
    %124 = vmatprep.subr.mxu0 0.0
    %125 = vmatpush1.msra.mxu0 0.0
    %126 = vmatprep.subr.mxu0 0.0
    %127 = vmatpush1.msra.mxu0 %v87
    %128 = vmatprep.subr.mxu0 0.0
    %129 = vmatpush1.msra.mxu0 %v86
    %130 = vmatprep.subr.mxu0 0.0
    %131 = vmatpush1.msra.mxu0 %v85
    %132 = vmatprep.subr.mxu0 0.0
    %133 = vmatpush1.msra.mxu0 %v84
    %134 = vmatprep.subr.mxu0 0.0
    %135 = vmatpush2.msra.mxu0 0.0
    %136 = vmatprep.subr.mxu0 0.0
    %137 = vmatpush2.msra.mxu0 0.0
    %138 = vmatprep.subr.mxu0 0.0
    %139 = vmatpush2.msra.mxu0 0.0
    %140 = vmatprep.subr.mxu0 0.0
    %141 = vmatpush2.msra.mxu0 0.0
    %142 = vmatprep.subr.mxu0 0.0
    %143 = vmatpush2.msra.mxu0 0.0
    %144 = vmatprep.subr.mxu0 0.0
    %145 = vmatpush2.msra.mxu0 0.0
    %146 = vmatprep.subr.mxu0 0.0
    %147 = vmatpush2.msra.mxu0 0.0
    %148 = vmatprep.subr.mxu0 0.0
    %149 = vmatpush2.msra.mxu0 0.0
    %150 = vmatprep.subr.mxu0 0.0
    %151 = vmatpush2.msra.mxu0 0.0
    %152 = vmatprep.subr.mxu0 0.0
    %153 = vmatpush2.msra.mxu0 0.0
    %154 = vmatprep.subr.mxu0 0.0
    %155 = vmatpush2.msra.mxu0 0.0
    %156 = vmatprep.subr.mxu0 0.0
    %157 = vmatpush2.msra.mxu0 0.0
    %158 = vmatprep.subr.mxu0 0.0
    %159 = vmatpush2.msra.mxu0 0.0
    %160 = vmatprep.subr.mxu0 0.0
    %161 = vmatpush2.msra.mxu0 0.0
    %162 = vmatprep.subr.mxu0 0.0
    %163 = vmatpush2.msra.mxu0 0.0
    %164 = vmatprep.subr.mxu0 0.0
    %165 = vmatpush2.msra.mxu0 0.0
    %166 = vmatprep.mubr.f32.mxu0 0.0
    %167 = vmatmul.mubr.f32.gmra.mxu0 %v97
    %v168 = vpop.f32.mrf.mxu0
    %v169 = vadd.f32 %v93, %v168
    %v170 = vpop.f32.mrf.mxu0
    %171 = vmatprep.mubr.f32.mxu0 0.0
    %172 = vmatmul.mubr.f32.gmra.mxu0 %v100
    %v173 = vpop.f32.mrf.mxu0
    %v174 = vadd.f32 %v93, %v173
    %v175 = vpop.f32.mrf.mxu0
    %176 = vdwg.mxu0
    %vm177 = vcmp.gt.f32.partialorder %v169, 0.0
    %vm178 = vcmp.gt.f32.partialorder %v174, 0.0
    %v179 = vmul.f32 %v169, 0.01
    %v180 = vmul.f32 %v174, 0.01
    %v181 = vsel %vm177, %v169, %v179
    %v182 = vsel %vm178, %v174, %v180
    %v183 = vld [vmem:[#allocation7] sm:$0xff]
    %v184 = vld [vmem:[#allocation7 + $0x8] sm:$0xff]
    %v185 = vld [vmem:[#allocation7 + $0x10] sm:$0xff]
    %v186 = vld [vmem:[#allocation7 + $0x18] sm:$0xff]
    %v187 = vld [vmem:[#allocation7 + $0x20] sm:$0xff]
    %v188 = vld [vmem:[#allocation7 + $0x28] sm:$0xff]
    %v189 = vld [vmem:[#allocation7 + $0x30] sm:$0xff]
    %v190 = vld [vmem:[#allocation7 + $0x38] sm:$0xff]
    %v191 = vld [vmem:[#allocation7 + $0x40] sm:$0xff]
    %v192 = vld [vmem:[#allocation7 + $0x48] sm:$0xff]
    %v193 = vld [vmem:[#allocation7 + $0x50] sm:$0xff]
    %v194 = vld [vmem:[#allocation7 + $0x58] sm:$0xff]
    %v195 = vld [vmem:[#allocation7 + $0x60] sm:$0xff]
    %v196 = vld [vmem:[#allocation7 + $0x68] sm:$0xff]
    %v197 = vld [vmem:[#allocation7 + $0x70] sm:$0xff]
    %v198 = vld [vmem:[#allocation7 + $0x78] sm:$0xff]
    %v199 = vld [vmem:[%s4] sm:$0x1]
    %v201 = vlaneseq
    %v202 = vshrl.u32 %v201, 7
    %v203 = vsub.s32 0, %v202
    %v204 = vrot.slane %v199, %v203
    %206 = vmatprep.subr.mxu0 0.0
    %207 = vmatpush1.msra.mxu0 %v198
    %208 = vmatprep.subr.mxu0 0.0
    %209 = vmatpush1.msra.mxu0 %v197
    %210 = vmatprep.subr.mxu0 0.0
    %211 = vmatpush1.msra.mxu0 %v196
    %212 = vmatprep.subr.mxu0 0.0
    %213 = vmatpush1.msra.mxu0 %v195
    %214 = vmatprep.subr.mxu0 0.0
    %215 = vmatpush1.msra.mxu0 %v194
    %216 = vmatprep.subr.mxu0 0.0
    %217 = vmatpush1.msra.mxu0 %v193
    %218 = vmatprep.subr.mxu0 0.0
    %219 = vmatpush1.msra.mxu0 %v192
    %220 = vmatprep.subr.mxu0 0.0
    %221 = vmatpush1.msra.mxu0 %v191
    %222 = vmatprep.subr.mxu0 0.0
    %223 = vmatpush1.msra.mxu0 %v190
    %224 = vmatprep.subr.mxu0 0.0
    %225 = vmatpush1.msra.mxu0 %v189
    %226 = vmatprep.subr.mxu0 0.0
    %227 = vmatpush1.msra.mxu0 %v188
    %228 = vmatprep.subr.mxu0 0.0
    %229 = vmatpush1.msra.mxu0 %v187
    %230 = vmatprep.subr.mxu0 0.0
    %231 = vmatpush1.msra.mxu0 %v186
    %232 = vmatprep.subr.mxu0 0.0
    %233 = vmatpush1.msra.mxu0 %v185
    %234 = vmatprep.subr.mxu0 0.0
    %235 = vmatpush1.msra.mxu0 %v184
    %236 = vmatprep.subr.mxu0 0.0
    %237 = vmatpush1.msra.mxu0 %v183
    %238 = vmatprep.subr.mxu0 0.0
    %239 = vmatpush2.msra.mxu0 0.0
    %240 = vmatprep.subr.mxu0 0.0
    %241 = vmatpush2.msra.mxu0 0.0
    %242 = vmatprep.subr.mxu0 0.0
    %243 = vmatpush2.msra.mxu0 0.0
    %244 = vmatprep.subr.mxu0 0.0
    %245 = vmatpush2.msra.mxu0 0.0
    %246 = vmatprep.subr.mxu0 0.0
    %247 = vmatpush2.msra.mxu0 0.0
    %248 = vmatprep.subr.mxu0 0.0
    %249 = vmatpush2.msra.mxu0 0.0
    %250 = vmatprep.subr.mxu0 0.0
    %251 = vmatpush2.msra.mxu0 0.0
    %252 = vmatprep.subr.mxu0 0.0
    %253 = vmatpush2.msra.mxu0 0.0
    %254 = vmatprep.subr.mxu0 0.0
    %255 = vmatpush2.msra.mxu0 0.0
    %256 = vmatprep.subr.mxu0 0.0
    %257 = vmatpush2.msra.mxu0 0.0
    %258 = vmatprep.subr.mxu0 0.0
    %259 = vmatpush2.msra.mxu0 0.0
    %260 = vmatprep.subr.mxu0 0.0
    %261 = vmatpush2.msra.mxu0 0.0
    %262 = vmatprep.subr.mxu0 0.0
    %263 = vmatpush2.msra.mxu0 0.0
    %264 = vmatprep.subr.mxu0 0.0
    %265 = vmatpush2.msra.mxu0 0.0
    %266 = vmatprep.subr.mxu0 0.0
    %267 = vmatpush2.msra.mxu0 0.0
    %268 = vmatprep.subr.mxu0 0.0
    %269 = vmatpush2.msra.mxu0 0.0
    %270 = vmatprep.mubr.f32.mxu0 0.0
    %271 = vmatmul.mubr.f32.gmra.mxu0 %v181
    %v272 = vpop.f32.mrf.mxu0
    %v273 = vadd.f32 %v204, %v272
    %v274 = vpop.f32.mrf.mxu0
    %275 = vmatprep.mubr.f32.mxu0 0.0
    %276 = vmatmul.mubr.f32.gmra.mxu0 %v182
    %v277 = vpop.f32.mrf.mxu0
    %v278 = vadd.f32 %v204, %v277
    %v279 = vpop.f32.mrf.mxu0
    %280 = vdwg.mxu0
    %vm281 = vcmp.gt.f32.partialorder %v273, 0.0
    %vm282 = vcmp.gt.f32.partialorder %v278, 0.0
    %v283 = vmul.f32 %v273, 0.01
    %v284 = vmul.f32 %v278, 0.01
    %v285 = vsel %vm281, %v273, %v283
    %v286 = vsel %vm282, %v278, %v284
    %v287 = vld [vmem:[#allocation8] sm:$0xff]
    %v288 = vld [vmem:[#allocation8 + $0x8] sm:$0xff]
    %v289 = vld [vmem:[#allocation8 + $0x10] sm:$0xff]
    %v290 = vld [vmem:[#allocation8 + $0x18] sm:$0xff]
    %v291 = vld [vmem:[#allocation8 + $0x20] sm:$0xff]
    %v292 = vld [vmem:[#allocation8 + $0x28] sm:$0xff]
    %v293 = vld [vmem:[#allocation8 + $0x30] sm:$0xff]
    %v294 = vld [vmem:[#allocation8 + $0x38] sm:$0xff]
    %v295 = vld [vmem:[#allocation8 + $0x40] sm:$0xff]
    %v296 = vld [vmem:[#allocation8 + $0x48] sm:$0xff]
    %v297 = vld [vmem:[#allocation8 + $0x50] sm:$0xff]
    %v298 = vld [vmem:[#allocation8 + $0x58] sm:$0xff]
    %v299 = vld [vmem:[#allocation8 + $0x60] sm:$0xff]
    %v300 = vld [vmem:[#allocation8 + $0x68] sm:$0xff]
    %v301 = vld [vmem:[#allocation8 + $0x70] sm:$0xff]
    %v302 = vld [vmem:[#allocation8 + $0x78] sm:$0xff]
    %v303 = vld [vmem:[%s6] sm:$0x1]
    %v305 = vlaneseq
    %v306 = vshrl.u32 %v305, 7
    %v307 = vsub.s32 0, %v306
    %v308 = vrot.slane %v303, %v307
    %310 = vmatprep.subr.mxu0 0.0
    %311 = vmatpush1.msra.mxu0 %v302
    %312 = vmatprep.subr.mxu0 0.0
    %313 = vmatpush1.msra.mxu0 %v301
    %314 = vmatprep.subr.mxu0 0.0
    %315 = vmatpush1.msra.mxu0 %v300
    %316 = vmatprep.subr.mxu0 0.0
    %317 = vmatpush1.msra.mxu0 %v299
    %318 = vmatprep.subr.mxu0 0.0
    %319 = vmatpush1.msra.mxu0 %v298
    %320 = vmatprep.subr.mxu0 0.0
    %321 = vmatpush1.msra.mxu0 %v297
    %322 = vmatprep.subr.mxu0 0.0
    %323 = vmatpush1.msra.mxu0 %v296
    %324 = vmatprep.subr.mxu0 0.0
    %325 = vmatpush1.msra.mxu0 %v295
    %326 = vmatprep.subr.mxu0 0.0
    %327 = vmatpush1.msra.mxu0 %v294
    %328 = vmatprep.subr.mxu0 0.0
    %329 = vmatpush1.msra.mxu0 %v293
    %330 = vmatprep.subr.mxu0 0.0
    %331 = vmatpush1.msra.mxu0 %v292
    %332 = vmatprep.subr.mxu0 0.0
    %333 = vmatpush1.msra.mxu0 %v291
    %334 = vmatprep.subr.mxu0 0.0
    %335 = vmatpush1.msra.mxu0 %v290
    %336 = vmatprep.subr.mxu0 0.0
    %337 = vmatpush1.msra.mxu0 %v289
    %338 = vmatprep.subr.mxu0 0.0
    %339 = vmatpush1.msra.mxu0 %v288
    %340 = vmatprep.subr.mxu0 0.0
    %341 = vmatpush1.msra.mxu0 %v287
    %342 = vmatprep.subr.mxu0 0.0
    %343 = vmatpush2.msra.mxu0 0.0
    %344 = vmatprep.subr.mxu0 0.0
    %345 = vmatpush2.msra.mxu0 0.0
    %346 = vmatprep.subr.mxu0 0.0
    %347 = vmatpush2.msra.mxu0 0.0
    %348 = vmatprep.subr.mxu0 0.0
    %349 = vmatpush2.msra.mxu0 0.0
    %350 = vmatprep.subr.mxu0 0.0
    %351 = vmatpush2.msra.mxu0 0.0
    %352 = vmatprep.subr.mxu0 0.0
    %353 = vmatpush2.msra.mxu0 0.0
    %354 = vmatprep.subr.mxu0 0.0
    %355 = vmatpush2.msra.mxu0 0.0
    %356 = vmatprep.subr.mxu0 0.0
    %357 = vmatpush2.msra.mxu0 0.0
    %358 = vmatprep.subr.mxu0 0.0
    %359 = vmatpush2.msra.mxu0 0.0
    %360 = vmatprep.subr.mxu0 0.0
    %361 = vmatpush2.msra.mxu0 0.0
    %362 = vmatprep.subr.mxu0 0.0
    %363 = vmatpush2.msra.mxu0 0.0
    %364 = vmatprep.subr.mxu0 0.0
    %365 = vmatpush2.msra.mxu0 0.0
    %366 = vmatprep.subr.mxu0 0.0
    %367 = vmatpush2.msra.mxu0 0.0
    %368 = vmatprep.subr.mxu0 0.0
    %369 = vmatpush2.msra.mxu0 0.0
    %370 = vmatprep.subr.mxu0 0.0
    %371 = vmatpush2.msra.mxu0 0.0
    %372 = vmatprep.subr.mxu0 0.0
    %373 = vmatpush2.msra.mxu0 0.0
    %374 = vmatprep.mubr.f32.mxu0 0.0
    %375 = vmatmul.mubr.f32.gmra.mxu0 %v285
    %v376 = vpop.f32.mrf.mxu0
    %v377 = vadd.f32 %v308, %v376
    %v378 = vpop.f32.mrf.mxu0
    %379 = vmatprep.mubr.f32.mxu0 0.0
    %380 = vmatmul.mubr.f32.gmra.mxu0 %v286
    %v381 = vpop.f32.mrf.mxu0
    %v382 = vadd.f32 %v308, %v381
    %v383 = vpop.f32.mrf.mxu0
    %384 = vdwg.mxu0
    %vm385 = vcmp.gt.f32.partialorder %v377, 0.0
    %vm386 = vcmp.gt.f32.partialorder %v382, 0.0
    %v387 = vmul.f32 %v377, 0.01
    %v388 = vmul.f32 %v382, 0.01
    %v389 = vsel %vm385, %v377, %v387
    %v390 = vsel %vm386, %v382, %v388
    %391 = vst [vmem:[#allocation10] sm:$0xff] %v389
    %392 = vst [vmem:[#allocation10 + $0x8] sm:$0xff] %v390
    // Predicated region
    $region46: #{_mlp3_forward_jit.1} parent=1 // pred_check
      _
    $region47: #{_mlp3_forward_jit.1} parent=1 // pred_check_branch
      %394 = sbr.rel (0) target = $region49
    $region48: #{_mlp3_forward_jit.1} parent=1 // pred_region
      %s396 = ssub.s32 256, 256
      %397 = vsyncadd [#allocation4], %s396
      %s398 = sshll.u32 [#allocation10], 4
      %s399 = int_to_ptr.vmem [resolvable:$true] %s398
      %404 = dma.vmem_to_hbm [thread:$0]  %s399, 256, %s7, [#allocation4], 128, 128, 8
    $region49: #{_mlp3_forward_jit.1} parent=1 // pred_fallthru
      _
    // Predicated region
    $region50: #{_mlp3_forward_jit.1} parent=1 // pred_check
      _
    $region51: #{_mlp3_forward_jit.1} parent=1 // pred_check_branch
      %406 = sbr.rel (0) target = $region53
    $region52: #{_mlp3_forward_jit.1} parent=1 // pred_region
      %407 = dma.done [#allocation4], 256
    $region53: #{_mlp3_forward_jit.1} parent=1 // pred_fallthru
      _
    %408 = vsyncpa [#allocation3], 1
    %409 = vsyncpa [#allocation6], 1
    %410 = vsyncpa [#allocation9], 1
    %411 = vsyncpa [#allocation4], 1

</llo_original>
